<compile_context>
chip_gen: v6e
topology: v6e:2x2x1
jax: 0.10.0
libtpu: 0.0.40
codegen_flags: <defaults>
</compile_context>

<pallas_src>
import functools

import jax
import jax.numpy as jnp
from jax.experimental import pallas as pl
from jax.experimental.pallas import tpu as pltpu

LANES = 128


def _layernorm_kernel(x_ref, g_ref, b_ref, o_ref, *, eps, approx):
    # x_ref: (1, C, TR, 128); g_ref / b_ref: (C, 1, 128); o_ref: (1, C, TR, 128)
    x = x_ref[0].astype(jnp.float32)                          # (C, TR, 128)

    # Channel reduction over the LEADING axis -> plain VPU adds across vregs
    # (no XLU sublane/lane reduce), fully dense even for tiny C.
    mean = jnp.mean(x, axis=0, keepdims=True)                 # (1, TR, 128)
    xc = x - mean                                             # reused below
    # Two-pass variance (unbiased=False) -> matches torch.var exactly.
    var = jnp.mean(xc * xc, axis=0, keepdims=True)            # (1, TR, 128)

    # One reciprocal per pixel (row-wise), not per (C, TR, 128) element.
    inv = pl.reciprocal(jnp.sqrt(var) + eps, approx=approx)   # (1, TR, 128)

    g = g_ref[...].astype(jnp.float32)                        # (C, 1, 128)
    b = b_ref[...].astype(jnp.float32)

    o_ref[0] = (xc * inv * g + b).astype(o_ref.dtype)         # (C, TR, 128)


@functools.partial(
    jax.jit,
    static_argnames=("eps", "vmem_budget_bytes", "vmem_limit_bytes",
                     "approx_reciprocal"),
)
def layernorm_nchw(x, g, b, eps=1e-5,
                   *,
                   vmem_budget_bytes=32 * 1024 * 1024,
                   vmem_limit_bytes=48 * 1024 * 1024,
                   approx_reciprocal=False):
    """x: (B, C, H, W); g, b: (1, C, 1, 1) as in the PyTorch module."""
    B, C, H, W = x.shape
    HW = H * W
    itemsize = jnp.dtype(x.dtype).itemsize

    # ---- spatial tile selection (dtype- & VMEM-working-set-aware) -----------
    R = -(-HW // LANES)                              # number of 128-lane rows
    pack = 32 // itemsize                            # sublane packing multiple
    # Working-set per spatial row: 2x input + 2x output pipeline buffers (I/O
    # dtype) plus ~2 full-tile f32 temporaries inside the kernel (x_f32, xc).
    bytes_per_row = C * LANES * (4 * itemsize + 2 * 4)
    budget_rows = max(pack, int(vmem_budget_bytes // bytes_per_row))

    # Guarantee >=2 programs on a parallel axis when B == 1 so both v7x
    # TensorCores get work; with B >= 2 the batch axis already provides that.
    want_tiles = 2 if B == 1 else 1

    if R <= budget_rows and (want_tiles == 1 or R < 2 * pack):
        # Whole spatial extent in one tile; legal even if R % pack != 0 because
        # the block equals the full array dim.
        TR, R_pad = R, R
    else:
        tr = min(budget_rows, -(-R // want_tiles))
        TR = max(pack, (tr // pack) * pack)          # packing-aligned tile
        R_pad = -(-R // TR) * TR                     # pad ragged tail tile
    HW_pad = R_pad * LANES

    # ---- layout plumbing in the wrapper (contiguous reshape / cheap pad) ----
    x2 = x.reshape(B, C, HW)
    if HW_pad != HW:
        # Zero padding is safe: the reduction is per-pixel over C; padded
        # pixels never mix with valid ones and are sliced off below.
        x2 = jnp.pad(x2, ((0, 0), (0, 0), (0, HW_pad - HW)))
    x4 = x2.reshape(B, C, R_pad, LANES)
    # Lane-dense parameter blocks: (C, 1, 128).
    g3 = jnp.broadcast_to(g.reshape(C, 1, 1), (C, 1, LANES))
    b3 = jnp.broadcast_to(b.reshape(C, 1, 1), (C, 1, LANES))

    grid = (B, R_pad // TR)

    n_elem = B * C * HW_pad
    cost = pl.CostEstimate(
        flops=8 * n_elem,
        transcendentals=2 * B * HW_pad,              # sqrt + reciprocal / pixel
        bytes_accessed=2 * n_elem * itemsize + 2 * C * LANES * itemsize,
    )

    out = pl.pallas_call(
        functools.partial(_layernorm_kernel, eps=eps, approx=approx_reciprocal),
        out_shape=jax.ShapeDtypeStruct((B, C, R_pad, LANES), x.dtype),
        grid_spec=pltpu.PrefetchScalarGridSpec(
            num_scalar_prefetch=0,
            grid=grid,
            in_specs=[
                pl.BlockSpec((1, C, TR, LANES), lambda i, j: (i, 0, j, 0)),
                pl.BlockSpec((C, 1, LANES), lambda i, j: (0, 0, 0)),
                pl.BlockSpec((C, 1, LANES), lambda i, j: (0, 0, 0)),
            ],
            out_specs=pl.BlockSpec((1, C, TR, LANES), lambda i, j: (i, 0, j, 0)),
        ),
        compiler_params=pltpu.CompilerParams(
            # Both axes are independent (per-image, per-pixel-tile) -> let
            # Mosaic shard across TensorCores on v7x and pipeline freely.
            dimension_semantics=("parallel", "parallel"),
            vmem_limit_bytes=vmem_limit_bytes,
        ),
        cost_estimate=cost,
    )(x4, g3, b3)

    out = out.reshape(B, C, HW_pad)
    if HW_pad != HW:
        out = out[:, :, :HW]
    return out.reshape(B, C, H, W)


if __name__ == "__main__":
    key = jax.random.PRNGKey(0)
    B, C, H, W = 2, 4, 16, 16
    x = jax.random.normal(key, (B, C, H, W), dtype=jnp.float32)

    # Parameters initialized exactly as the module's __init__: ones / zeros.
    g = jnp.ones((1, C, 1, 1), dtype=jnp.float32)
    b = jnp.zeros((1, C, 1, 1), dtype=jnp.float32)

    out = layernorm_nchw(x, g, b, eps=1e-5)
    out = jax.block_until_ready(out)

    # Pure-JAX reference check (same semantics as the torch forward).
    mean = jnp.mean(x, axis=1, keepdims=True)
    var = jnp.mean((x - mean) ** 2, axis=1, keepdims=True)
    ref = (x - mean) / (jnp.sqrt(var) + 1e-5) * g + b
    assert jnp.allclose(out, ref, atol=1e-5, rtol=1e-5), "mismatch vs reference"

    print("KERNEL_OK")
</pallas_src>

<mosaic_0001>
module attributes {stable_mosaic.version = 11 : i64} {
  func.func @_layernorm_kernel(%arg0: i32, %arg1: i32, %arg2: memref<1x4x2x128xf32, #tpu.memory_space<vmem>>, %arg3: memref<4x1x128xf32, #tpu.memory_space<vmem>>, %arg4: memref<4x1x128xf32, #tpu.memory_space<vmem>>, %arg5: memref<1x4x2x128xf32, #tpu.memory_space<vmem>>) attributes {dimension_semantics = [#tpu.dimension_semantics<parallel>, #tpu.dimension_semantics<parallel>], iteration_bounds = array<i64: 2, 1>, scalar_prefetch = 0 : i64, scratch_operands = 0 : i64, tpu.core_type = #tpu.core_type<tc>, window_params = [{transform_indices = @transform_0, window_bounds = array<i64: 1, 4, 2, 128>}, {pipeline_mode = #tpu.pipeline_mode<synchronous>, transform_indices = @transform_1, window_bounds = array<i64: 4, 1, 128>}, {pipeline_mode = #tpu.pipeline_mode<synchronous>, transform_indices = @transform_2, window_bounds = array<i64: 4, 1, 128>}, {transform_indices = @transform_3, window_bounds = array<i64: 1, 4, 2, 128>}]} {
    %c0 = arith.constant 0 : index
    %c0_0 = arith.constant 0 : index
    %c0_1 = arith.constant 0 : index
    %c0_2 = arith.constant 0 : index
    %0 = vector.load %arg2[%c0, %c0_0, %c0_1, %c0_2] : memref<1x4x2x128xf32, #tpu.memory_space<vmem>>, vector<1x4x2x128xf32>
    %1 = vector.shape_cast %0 : vector<1x4x2x128xf32> to vector<4x2x128xf32>
    %cst = arith.constant dense<0.000000e+00> : vector<2x128xf32>
    %2 = vector.multi_reduction <add>, %1, %cst [0] : vector<4x2x128xf32> to vector<2x128xf32>
    %3 = vector.shape_cast %2 : vector<2x128xf32> to vector<1x2x128xf32>
    %cst_3 = arith.constant 4.000000e+00 : f32
    %4 = vector.broadcast %cst_3 : f32 to vector<1x2x128xf32>
    %5 = arith.divf %3, %4 : vector<1x2x128xf32>
    %6 = vector.broadcast %5 : vector<1x2x128xf32> to vector<4x2x128xf32>
    %7 = arith.subf %1, %6 : vector<4x2x128xf32>
    %8 = arith.mulf %7, %7 : vector<4x2x128xf32>
    %cst_4 = arith.constant dense<0.000000e+00> : vector<2x128xf32>
    %9 = vector.multi_reduction <add>, %8, %cst_4 [0] : vector<4x2x128xf32> to vector<2x128xf32>
    %10 = vector.shape_cast %9 : vector<2x128xf32> to vector<1x2x128xf32>
    %cst_5 = arith.constant 4.000000e+00 : f32
    %11 = vector.broadcast %cst_5 : f32 to vector<1x2x128xf32>
    %12 = arith.divf %10, %11 : vector<1x2x128xf32>
    %13 = math.sqrt %12 : vector<1x2x128xf32>
    %cst_6 = arith.constant 9.99999974E-6 : f32
    %14 = vector.broadcast %cst_6 : f32 to vector<1x2x128xf32>
    %15 = arith.addf %13, %14 : vector<1x2x128xf32>
    %16 = tpu.reciprocal %15 : vector<1x2x128xf32> -> vector<1x2x128xf32>
    %c0_7 = arith.constant 0 : index
    %c0_8 = arith.constant 0 : index
    %c0_9 = arith.constant 0 : index
    %17 = vector.load %arg3[%c0_7, %c0_8, %c0_9] : memref<4x1x128xf32, #tpu.memory_space<vmem>>, vector<4x1x128xf32>
    %c0_10 = arith.constant 0 : index
    %c0_11 = arith.constant 0 : index
    %c0_12 = arith.constant 0 : index
    %18 = vector.load %arg4[%c0_10, %c0_11, %c0_12] : memref<4x1x128xf32, #tpu.memory_space<vmem>>, vector<4x1x128xf32>
    %19 = vector.broadcast %16 : vector<1x2x128xf32> to vector<4x2x128xf32>
    %20 = arith.mulf %7, %19 : vector<4x2x128xf32>
    %21 = vector.broadcast %17 : vector<4x1x128xf32> to vector<4x2x128xf32>
    %22 = arith.mulf %20, %21 : vector<4x2x128xf32>
    %23 = vector.broadcast %18 : vector<4x1x128xf32> to vector<4x2x128xf32>
    %24 = arith.addf %22, %23 : vector<4x2x128xf32>
    %c0_13 = arith.constant 0 : index
    %c0_14 = arith.constant 0 : index
    %c0_15 = arith.constant 0 : index
    %c0_16 = arith.constant 0 : index
    %25 = vector.load %arg5[%c0_13, %c0_14, %c0_15, %c0_16] : memref<1x4x2x128xf32, #tpu.memory_space<vmem>>, vector<1x4x2x128xf32>
    %26 = vector.shape_cast %25 : vector<1x4x2x128xf32> to vector<4x2x128xf32>
    %27 = vector.shape_cast %24 : vector<4x2x128xf32> to vector<1x4x2x128xf32>
    tpu.vector_store %arg5[%c0_13, %c0_14, %c0_15, %c0_16], %27 {strides = array<i32>} : memref<1x4x2x128xf32, #tpu.memory_space<vmem>>, vector<1x4x2x128xf32>,
    return
  }
  func.func @transform_0(%arg0: i32, %arg1: i32) -> (i32, i32, i32, i32) {
    %c0_i32 = arith.constant 0 : i32
    %c0_i32_0 = arith.constant 0 : i32
    %c0_i32_1 = arith.constant 0 : i32
    return %arg0, %c0_i32, %arg1, %c0_i32_0 : i32, i32, i32, i32
  }
  func.func @transform_1(%arg0: i32, %arg1: i32) -> (i32, i32, i32) {
    %c0_i32 = arith.constant 0 : i32
    %c0_i32_0 = arith.constant 0 : i32
    %c0_i32_1 = arith.constant 0 : i32
    %c0_i32_2 = arith.constant 0 : i32
    return %c0_i32, %c0_i32_0, %c0_i32_1 : i32, i32, i32
  }
  func.func @transform_2(%arg0: i32, %arg1: i32) -> (i32, i32, i32) {
    %c0_i32 = arith.constant 0 : i32
    %c0_i32_0 = arith.constant 0 : i32
    %c0_i32_1 = arith.constant 0 : i32
    %c0_i32_2 = arith.constant 0 : i32
    return %c0_i32, %c0_i32_0, %c0_i32_1 : i32, i32, i32
  }
  func.func @transform_3(%arg0: i32, %arg1: i32) -> (i32, i32, i32, i32) {
    %c0_i32 = arith.constant 0 : i32
    %c0_i32_0 = arith.constant 0 : i32
    %c0_i32_1 = arith.constant 0 : i32
    return %arg0, %c0_i32, %arg1, %c0_i32_0 : i32, i32, i32, i32
  }
}

</mosaic_0001>

<llo_original>
// kernel: layernorm_nchw.1
$region0: #{layernorm_nchw.1}
  #allocation0 [shape = 'u32[]', space=smem, size = 0x4, offset = 0x4, fixed_abs, tag = 'smem constant byte address 0x4 - core index']
  #allocation1 [shape = 'u32[144,128]{1,0:T(1,128)}', space=vmem, size = 0x12000, scoped, tag = 'internal scratch']
  %s0 = inlined_call_operand.vmem [shape: f32[2,4,2,128], index: 0, kind: input, shape index: {}]
  %s1 = inlined_call_operand.vmem [shape: f32[4,1,128], index: 1, kind: input, shape index: {}]
  %s2 = inlined_call_operand.vmem [shape: f32[4,1,128], index: 2, kind: input, shape index: {}]
  %s3 = inlined_call_operand.vmem [shape: f32[2,4,2,128], index: 3, kind: output, shape index: {}]
  %s4 = sld [smem:[#allocation0]]
  $region45: #{layernorm_nchw.1} parent=0
    _
  %s6 = ssub.s32 1, %s4
  %s7 = scalar_select 0, %s6, %s4
  loop: start=0, step=1, limit=4
  $region2: #{layernorm_nchw.1} parent=0 // loop_pre_header
    _
  $region3: #{layernorm_nchw.1} parent=0 // loop_header
    %s9 = sphi 0, %s13
    %p10 = scmp.ge.s32.totalorder %s9, 4
    %s16 = sphi 0, %s28
    %s17 = sphi 0, %s24
    %s18 = sphi 0, %s16
    %s19 = sphi 0, %s17
    %s20 = sphi 0, %s18
    %s21 = sphi 0, %s19
    %s33 = sphi 0, %s35
    %s36 = sphi 0, %s33
    %s37 = sphi 0, %s36
    %s53 = sphi 0, %s37
    %s57 = sphi 0, %s57
    %s59 = sphi 0, %s57
    %s60 = sphi 0, %s59
    %s74 = sphi 0, %s60
    %s78 = sphi 0, %s78
    %s80 = sphi 0, %s78
    %s81 = sphi 0, %s80
    %s95 = sphi 0, %s81
    %s103 = sphi 0, %s105
    %s106 = sphi 0, %s103
    %s107 = sphi 0, %s106
    %s123 = sphi 0, %s107
  $region4: #{layernorm_nchw.1} parent=0 // loop_header_branch
    %12 = sbr.rel (%p10) target = $region8
  $region5: #{layernorm_nchw.1} parent=0 // loop_body
    %s14 = ssub.s32 %s9, 1
    %s15 = ssub.s32 %s9, 2
    %s22 = sadd.s32 1, %s17
    %p23 = scmp.ge.s32.totalorder %s22, 1
    %s24 = scalar_select %p23, 0, %s22
    %s25 = sadd.s32 1, %s16
    %s26 = scalar_select %p23, %s25, %s16
    %p27 = scmp.ge.s32.totalorder %s26, 2
    %s28 = scalar_select %p27, 0, %s26
    %s29 = ssub.s32 %s16, %s28
    %s30 = ssub.s32 %s17, %s24
    %s31 = sor.u32 %s29, %s30
    %p32 = scmp.eq.s32.totalorder %s31, 0
    %s34 = sadd.s32 %s33, 1
    %s35 = scalar_select %p32, %s33, %s34
    %p38 = pneg %p32
    %p39 = scmp.eq.s32.totalorder %s9, 1
    %p40 = por %p38, %p39
    %p41 = scmp.ne.s32.totalorder %s33, %s36
    %p42 = scmp.eq.s32.totalorder %s9, 0
    %p43 = por %p41, %p42
    %p44 = scmp.ne.s32.totalorder %s33, %s36
    %p45 = scmp.eq.s32.totalorder %s14, 1
    %p46 = por %p44, %p45
    %p47 = scmp.ne.s32.totalorder %s36, %s37
    %p48 = scmp.eq.s32.totalorder %s14, 0
    %p49 = por %p47, %p48
    %p50 = scmp.ne.s32.totalorder %s36, %s37
    %p51 = scmp.eq.s32.totalorder %s15, 1
    %p52 = por %p50, %p51
    %p54 = scmp.ne.s32.totalorder %s37, %s53
    %p55 = scmp.eq.s32.totalorder %s15, 0
    %p56 = por %p54, %p55
    %s58 = sadd.s32 %s57, 1
    %p61 = scmp.eq.s32.totalorder %s9, 1
    %p62 = scmp.ne.s32.totalorder %s57, %s59
    %p63 = scmp.eq.s32.totalorder %s9, 0
    %p64 = por %p62, %p63
    %p65 = scmp.ne.s32.totalorder %s57, %s59
    %p66 = scmp.eq.s32.totalorder %s14, 1
    %p67 = por %p65, %p66
    %p68 = scmp.ne.s32.totalorder %s59, %s60
    %p69 = scmp.eq.s32.totalorder %s14, 0
    %p70 = por %p68, %p69
    %p71 = scmp.ne.s32.totalorder %s59, %s60
    %p72 = scmp.eq.s32.totalorder %s15, 1
    %p73 = por %p71, %p72
    %p75 = scmp.ne.s32.totalorder %s60, %s74
    %p76 = scmp.eq.s32.totalorder %s15, 0
    %p77 = por %p75, %p76
    %s79 = sadd.s32 %s78, 1
    %p82 = scmp.eq.s32.totalorder %s9, 1
    %p83 = scmp.ne.s32.totalorder %s78, %s80
    %p84 = scmp.eq.s32.totalorder %s9, 0
    %p85 = por %p83, %p84
    %p86 = scmp.ne.s32.totalorder %s78, %s80
    %p87 = scmp.eq.s32.totalorder %s14, 1
    %p88 = por %p86, %p87
    %p89 = scmp.ne.s32.totalorder %s80, %s81
    %p90 = scmp.eq.s32.totalorder %s14, 0
    %p91 = por %p89, %p90
    %p92 = scmp.ne.s32.totalorder %s80, %s81
    %p93 = scmp.eq.s32.totalorder %s15, 1
    %p94 = por %p92, %p93
    %p96 = scmp.ne.s32.totalorder %s81, %s95
    %p97 = scmp.eq.s32.totalorder %s15, 0
    %p98 = por %p96, %p97
    %s99 = ssub.s32 %s16, %s28
    %s100 = ssub.s32 %s17, %s24
    %s101 = sor.u32 %s99, %s100
    %p102 = scmp.eq.s32.totalorder %s101, 0
    %s104 = sadd.s32 %s103, 1
    %s105 = scalar_select %p102, %s103, %s104
    %p108 = pneg %p102
    %p109 = scmp.eq.s32.totalorder %s9, 1
    %p110 = por %p108, %p109
    %p111 = scmp.ne.s32.totalorder %s103, %s106
    %p112 = scmp.eq.s32.totalorder %s9, 0
    %p113 = por %p111, %p112
    %p114 = scmp.ne.s32.totalorder %s103, %s106
    %p115 = scmp.eq.s32.totalorder %s14, 1
    %p116 = por %p114, %p115
    %p117 = scmp.ne.s32.totalorder %s106, %s107
    %p118 = scmp.eq.s32.totalorder %s14, 0
    %p119 = por %p117, %p118
    %p120 = scmp.ne.s32.totalorder %s106, %s107
    %p121 = scmp.eq.s32.totalorder %s15, 1
    %p122 = por %p120, %p121
    %p124 = scmp.ne.s32.totalorder %s107, %s123
    %p125 = scmp.eq.s32.totalorder %s15, 0
    %p126 = por %p124, %p125
    %p127 = scmp.le.s32.totalorder 1, %s9
    %p128 = scmp.lt.s32.totalorder %s9, 3
    %p129 = pnand %p127, %p128
    %p130 = pneg %p129
    // Predicated region
    $region9: #{layernorm_nchw.1} parent=5 // pred_check
      _
    $region10: #{layernorm_nchw.1} parent=5 // pred_check_branch
      %132 = sbr.rel (%p129) target = $region12
    $region11: #{layernorm_nchw.1} parent=5 // pred_region
      %s133 = ssub.s32 %s9, 1
      // Predicated region
      $region13: #{layernorm_nchw.1} parent=11 // pred_check
        %p134 = pneg %p70
      $region14: #{layernorm_nchw.1} parent=11 // pred_check_branch
        %136 = sbr.rel (%p134) target = $region16
      $region15: #{layernorm_nchw.1} parent=11 // pred_region
        _
      $region16: #{layernorm_nchw.1} parent=11 // pred_fallthru
        _
      // Predicated region
      $region17: #{layernorm_nchw.1} parent=11 // pred_check
        %p137 = pneg %p91
      $region18: #{layernorm_nchw.1} parent=11 // pred_check_branch
        %139 = sbr.rel (%p137) target = $region20
      $region19: #{layernorm_nchw.1} parent=11 // pred_region
        _
      $region20: #{layernorm_nchw.1} parent=11 // pred_fallthru
        _
    $region12: #{layernorm_nchw.1} parent=5 // pred_fallthru
      _
    %p140 = scmp.lt.s32.totalorder %s9, 2
    // Predicated region
    $region21: #{layernorm_nchw.1} parent=5 // pred_check
      %p141 = pneg %p140
    $region22: #{layernorm_nchw.1} parent=5 // pred_check_branch
      %143 = sbr.rel (%p141) target = $region24
    $region23: #{layernorm_nchw.1} parent=5 // pred_region
      // Predicated region
      $region25: #{layernorm_nchw.1} parent=23 // pred_check
        %p144 = pneg %p43
      $region26: #{layernorm_nchw.1} parent=23 // pred_check_branch
        %146 = sbr.rel (%p144) target = $region28
      $region27: #{layernorm_nchw.1} parent=23 // pred_region
        %p147 = scmp.lt.s32.totalorder %s16, 1
        %s148 = scalar_select %p147, %s16, 1
        %p149 = scmp.lt.s32.totalorder %s17, 0
        %s150 = scalar_select %p149, %s17, 0
        %s151 = smul.addr %s148, 4
        %s152 = sadd.s32 %s150, %s151
        %s153 = smul.addr %s152, 2
        %s154 = scalar_lea.vmem %s0, %s153
      $region28: #{layernorm_nchw.1} parent=23 // pred_fallthru
        _
    $region24: #{layernorm_nchw.1} parent=5 // pred_fallthru
      _
    %p155 = scmp.le.s32.totalorder 1, %s9
    %p156 = scmp.lt.s32.totalorder %s9, 3
    %p157 = pnand %p155, %p156
    %p158 = pneg %p157
    // Predicated region
    $region29: #{layernorm_nchw.1} parent=5 // pred_check
      _
    $region30: #{layernorm_nchw.1} parent=5 // pred_check_branch
      %160 = sbr.rel (%p157) target = $region32
    $region31: #{layernorm_nchw.1} parent=5 // pred_region
      %s161 = ssub.s32 %s9, 1
      %p162 = scmp.lt.s32.totalorder %s18, 1
      %s163 = scalar_select %p162, %s18, 1
      %p164 = scmp.lt.s32.totalorder %s19, 0
      %s165 = scalar_select %p164, %s19, 0
      %s166 = smul.addr %s163, 4
      %s167 = sadd.s32 %s165, %s166
      %s168 = smul.addr %s167, 2
      %s169 = scalar_lea.vmem %s0, %s168
      %p170 = pneg %p49
      %p171 = pneg %p46
      %p172 = pneg %p70
      %p173 = pneg %p67
      %p174 = pneg %p91
      %p175 = pneg %p88
      %p176 = pneg %p119
      %p177 = pneg %p116
      %p178 = scmp.lt.s32.totalorder %s18, 1
      %s179 = scalar_select %p178, %s18, 1
      %p180 = scmp.lt.s32.totalorder %s19, 0
      %s181 = scalar_select %p180, %s19, 0
      %s182 = smul.addr %s179, 4
      %s183 = sadd.s32 %s181, %s182
      %s184 = smul.addr %s183, 2
      %s185 = scalar_lea.vmem %s3, %s184
      %p186 = scmp.lt.s32.totalorder %s18, 1
      %s187 = scalar_select %p186, %s18, 1
      %p188 = scmp.lt.s32.totalorder %s19, 0
      %s189 = scalar_select %p188, %s19, 0
      %s190 = smul.addr %s187, 4
      %s191 = sadd.s32 %s189, %s190
      %s192 = smul.addr %s191, 2
      %s193 = scalar_lea.vmem %s0, %s192
      %p194 = scmp.lt.s32.totalorder %s18, 1
      %s195 = scalar_select %p194, %s18, 1
      %p196 = scmp.lt.s32.totalorder %s19, 0
      %s197 = scalar_select %p196, %s19, 0
      %s198 = smul.addr %s195, 4
      %s199 = sadd.s32 %s197, %s198
      %s200 = smul.addr %s199, 2
      %s201 = scalar_lea.vmem %s3, %s200
      %v202 = vld [vmem:[%s193] sm:$0x3]
      %v203 = vld [vmem:[%s193 + $0x2] sm:$0x3]
      %v204 = vld [vmem:[%s193 + $0x4] sm:$0x3]
      %v205 = vld [vmem:[%s193 + $0x6] sm:$0x3]
      %vm206 = vcmask 1041408
      %v207 = vsel %vm206, %v202, 0.0
      %v208 = vsel %vm206, %v203, 0.0
      %v209 = vadd.f32 %v207, %v208
      %v210 = vsel %vm206, %v204, 0.0
      %v211 = vadd.f32 %v209, %v210
      %v212 = vsel %vm206, %v205, 0.0
      %v213 = vadd.f32 %v211, %v212
      %v214 = vrcp.pop 4.0
      %v215 = vmul.f32 %v213, %v214
      %v216 = vsub.f32 %v202, %v215
      %v217 = vsub.f32 %v203, %v215
      %v218 = vsub.f32 %v204, %v215
      %v219 = vsub.f32 %v205, %v215
      %v220 = vmul.f32 %v216, %v216
      %v221 = vmul.f32 %v217, %v217
      %v222 = vmul.f32 %v218, %v218
      %v223 = vmul.f32 %v219, %v219
      %v224 = vsel %vm206, %v220, 0.0
      %v225 = vsel %vm206, %v221, 0.0
      %v226 = vadd.f32 %v224, %v225
      %v227 = vsel %vm206, %v222, 0.0
      %v228 = vadd.f32 %v226, %v227
      %v229 = vsel %vm206, %v223, 0.0
      %v230 = vadd.f32 %v228, %v229
      %v231 = vmul.f32 %v230, %v214
      %v232 = vrsqrt.pop %v231
      %v233 = vmul.f32 %v231, %v232
      %vm234 = vcmp.eq.f32.partialorder %v231, inf
      %v235 = vsel %vm234, %v231, %v233
      %vm236 = vcmp.eq.f32.partialorder %v231, 0.0
      %v237 = vand.u32 %v231, 2147483648
      %v238 = vsel %vm236, %v237, %v235
      %v239 = vadd.f32 %v238, 1e-05
      %v240 = vrcp.pop %v239
      %v241 = vld [vmem:[%s1] sm:$0x1]
      %v242 = vld [vmem:[%s1 + $0x1] sm:$0x1]
      %v243 = vld [vmem:[%s1 + $0x2] sm:$0x1]
      %v244 = vld [vmem:[%s1 + $0x3] sm:$0x1]
      %v245 = vld [vmem:[%s2] sm:$0x1]
      %v246 = vld [vmem:[%s2 + $0x1] sm:$0x1]
      %v247 = vld [vmem:[%s2 + $0x2] sm:$0x1]
      %v248 = vld [vmem:[%s2 + $0x3] sm:$0x1]
      %v249 = vmul.f32 %v216, %v240
      %v250 = vmul.f32 %v217, %v240
      %v251 = vmul.f32 %v218, %v240
      %v252 = vmul.f32 %v219, %v240
      %v257 = vlaneseq
      %v258 = vshrl.u32 %v257, 7
      %v259 = vsub.s32 0, %v258
      %v260 = vrot.slane %v241, %v259
      %v261 = vlaneseq
      %v262 = vshrl.u32 %v261, 7
      %v263 = vsub.s32 0, %v262
      %v264 = vrot.slane %v242, %v263
      %v265 = vlaneseq
      %v266 = vshrl.u32 %v265, 7
      %v267 = vsub.s32 0, %v266
      %v268 = vrot.slane %v243, %v267
      %v269 = vlaneseq
      %v270 = vshrl.u32 %v269, 7
      %v271 = vsub.s32 0, %v270
      %v272 = vrot.slane %v244, %v271
      %v277 = vmul.f32 %v249, %v260
      %v278 = vmul.f32 %v250, %v264
      %v279 = vmul.f32 %v251, %v268
      %v280 = vmul.f32 %v252, %v272
      %v285 = vlaneseq
      %v286 = vshrl.u32 %v285, 7
      %v287 = vsub.s32 0, %v286
      %v288 = vrot.slane %v245, %v287
      %v289 = vlaneseq
      %v290 = vshrl.u32 %v289, 7
      %v291 = vsub.s32 0, %v290
      %v292 = vrot.slane %v246, %v291
      %v293 = vlaneseq
      %v294 = vshrl.u32 %v293, 7
      %v295 = vsub.s32 0, %v294
      %v296 = vrot.slane %v247, %v295
      %v297 = vlaneseq
      %v298 = vshrl.u32 %v297, 7
      %v299 = vsub.s32 0, %v298
      %v300 = vrot.slane %v248, %v299
      %v305 = vadd.f32 %v277, %v288
      %v306 = vadd.f32 %v278, %v292
      %v307 = vadd.f32 %v279, %v296
      %v308 = vadd.f32 %v280, %v300
      %309 = vst [vmem:[%s201] sm:$0x3] %v305
      %310 = vst [vmem:[%s201 + $0x2] sm:$0x3] %v306
      %311 = vst [vmem:[%s201 + $0x4] sm:$0x3] %v307
      %312 = vst [vmem:[%s201 + $0x6] sm:$0x3] %v308
      %p313 = scmp.lt.s32.totalorder %s18, 1
      %s314 = scalar_select %p313, %s18, 1
      %p315 = scmp.lt.s32.totalorder %s19, 0
      %s316 = scalar_select %p315, %s19, 0
      %s317 = smul.addr %s314, 4
      %s318 = sadd.s32 %s316, %s317
      %s319 = smul.addr %s318, 2
      %s320 = scalar_lea.vmem %s3, %s319
      // Predicated region
      $region33: #{layernorm_nchw.1} parent=31 // pred_check
        %p321 = pneg %p116
      $region34: #{layernorm_nchw.1} parent=31 // pred_check_branch
        %323 = sbr.rel (%p321) target = $region36
      $region35: #{layernorm_nchw.1} parent=31 // pred_region
        _
      $region36: #{layernorm_nchw.1} parent=31 // pred_fallthru
        _
    $region32: #{layernorm_nchw.1} parent=5 // pred_fallthru
      _
    %p324 = scmp.le.s32.totalorder 2, %s9
    // Predicated region
    $region37: #{layernorm_nchw.1} parent=5 // pred_check
      %p325 = pneg %p324
    $region38: #{layernorm_nchw.1} parent=5 // pred_check_branch
      %327 = sbr.rel (%p325) target = $region40
    $region39: #{layernorm_nchw.1} parent=5 // pred_region
      %s328 = ssub.s32 %s9, 2
      // Predicated region
      $region41: #{layernorm_nchw.1} parent=39 // pred_check
        %p329 = pneg %p122
      $region42: #{layernorm_nchw.1} parent=39 // pred_check_branch
        %331 = sbr.rel (%p329) target = $region44
      $region43: #{layernorm_nchw.1} parent=39 // pred_region
        %p332 = scmp.lt.s32.totalorder %s20, 1
        %s333 = scalar_select %p332, %s20, 1
        %p334 = scmp.lt.s32.totalorder %s21, 0
        %s335 = scalar_select %p334, %s21, 0
        %s336 = smul.addr %s333, 4
        %s337 = sadd.s32 %s335, %s336
        %s338 = smul.addr %s337, 2
        %s339 = scalar_lea.vmem %s3, %s338
      $region44: #{layernorm_nchw.1} parent=39 // pred_fallthru
        _
    $region40: #{layernorm_nchw.1} parent=5 // pred_fallthru
      _
  $region6: #{layernorm_nchw.1} parent=0 // loop_footer
    %s13 = sadd.s32 1, %s9
  $region7: #{layernorm_nchw.1} parent=0 // loop_footer_branch
    %8 = sbr.rel target = $region3
  $region8: #{layernorm_nchw.1} parent=0 // loop_exit
    _

</llo_original>
